<compile_context>
chip_gen: v7x
topology: tpu7x:2x2x1
jax: 0.10.0
libtpu: 0.0.40
codegen_flags: <defaults>
</compile_context>

<pallas_src>
import math
import functools

import jax
import jax.numpy as jnp
from jax.experimental import pallas as pl
from jax.experimental.pallas import tpu as pltpu


def _gin_core(a, h, w, b, inv_n):
    """Shared fused body.

    a: (N, N) bf16 adjacency with (1+eps) folded onto the diagonal
    h: (N, D) bf16 node features
    w: (D, D) bf16 lin1.weight.T
    b: (1, D) fp32 bias row
    returns (1, D) fp32 mean-pooled readout.
    """
    # conv1: z1 = (1+eps)*h + A @ h  ==  A' @ h   (MXU, fp32 accumulate)
    z1 = jnp.dot(a, h, preferred_element_type=jnp.float32)
    x1 = jnp.maximum(
        jnp.dot(z1.astype(w.dtype), w, preferred_element_type=jnp.float32) + b, 0.0)
    # (outer F.relu in GIN.forward is idempotent after the internal relu)

    # conv2 (no internal activation) + outer relu
    z2 = jnp.dot(a, x1.astype(h.dtype), preferred_element_type=jnp.float32)
    x2 = jnp.maximum(
        jnp.dot(z2.astype(w.dtype), w, preferred_element_type=jnp.float32) + b, 0.0)

    # AvgPooling: mean over nodes -> (1, D)
    return jnp.sum(x2, axis=0, keepdims=True) * inv_n


def _gin_kernel_single(a_ref, h_ref, w_ref, b_ref, out_ref, *, inv_n):
    out_ref[...] = _gin_core(
        a_ref[...], h_ref[...], w_ref[...], b_ref[...], inv_n
    ).astype(out_ref.dtype)


def _gin_kernel_batched(a_ref, h_ref, w_ref, b_ref, out_ref, *, inv_n):
    # Blocks: a_ref (1, N, N), h_ref (1, N, D), w_ref (D, D), b_ref (1, D), out_ref (1, 1, D)
    out_ref[0] = _gin_core(
        a_ref[0], h_ref[0], w_ref[...], b_ref[...], inv_n
    ).astype(out_ref.dtype)


def _fold_self_loop(adj, eps):
    n = adj.shape[-1]
    eye = (1.0 + eps) * jnp.eye(n, dtype=jnp.float32)
    return adj.astype(jnp.float32) + eye


def gin_forward(adj, h, weight, bias, *, eps: float = 0.0):
    """Single-graph fused GIN forward.

    adj:    (N, N) dense weighted adjacency, adj[dst, src] = edge_weight (0 if no edge)
    h:      (N, D) node features
    weight: (D, D) = lin1.weight.T (so y = x @ weight + bias)
    bias:   (D,)
    returns (1, D) graph readout (AvgPooling).
    """
    N, D = h.shape
    assert adj.shape == (N, N)
    assert weight.shape == (D, D), "shared lin1 requires input_dim == embed_dim"

    a_bf = _fold_self_loop(adj, eps).astype(jnp.bfloat16)      # self-loop folded, bf16
    h_bf = h.astype(jnp.bfloat16)
    w_bf = weight.astype(jnp.bfloat16)
    b2d = bias.reshape(1, D).astype(jnp.float32)

    kernel = functools.partial(_gin_kernel_single, inv_n=1.0 / float(N))

    # No grid: the whole (small) problem lives in VMEM, read once, written once.
    return pl.pallas_call(
        kernel,
        out_shape=jax.ShapeDtypeStruct((1, D), jnp.float32),
        in_specs=[pl.BlockSpec(memory_space=pltpu.MemorySpace.VMEM)] * 4,
        out_specs=pl.BlockSpec(memory_space=pltpu.MemorySpace.VMEM),
    )(a_bf, h_bf, w_bf, b2d)


def gin_forward_batched(adj_b, h_b, weight, bias, *, eps: float = 0.0):
    """Batched GIN forward over B independent graphs.

    adj_b: (B, N, N), h_b: (B, N, D), weight: (D, D), bias: (D,)
    returns (B, 1, D) per-graph readouts.
    """
    B, N, _ = adj_b.shape
    _, _, D = h_b.shape
    assert adj_b.shape == (B, N, N) and h_b.shape == (B, N, D)
    assert weight.shape == (D, D)

    a_bf = _fold_self_loop(adj_b, eps).astype(jnp.bfloat16)
    h_bf = h_b.astype(jnp.bfloat16)
    w_bf = weight.astype(jnp.bfloat16)
    b2d = bias.reshape(1, D).astype(jnp.float32)

    kernel = functools.partial(_gin_kernel_batched, inv_n=1.0 / float(N))

    return pl.pallas_call(
        kernel,
        out_shape=jax.ShapeDtypeStruct((B, 1, D), jnp.float32),
        grid=(B,),
        in_specs=[
            pl.BlockSpec((1, N, N), lambda g: (g, 0, 0)),   # per-graph adjacency
            pl.BlockSpec((1, N, D), lambda g: (g, 0, 0)),   # per-graph features
            pl.BlockSpec((D, D), lambda g: (0, 0)),         # shared lin1 weight (resident)
            pl.BlockSpec((1, D), lambda g: (0, 0)),         # shared bias row (resident)
        ],
        out_specs=pl.BlockSpec((1, 1, D), lambda g: (g, 0, 0)),
        compiler_params=pltpu.CompilerParams(
            dimension_semantics=("parallel",)),             # split graphs over v7x's 2 TCs
    )(a_bf, h_bf, w_bf, b2d)


def gin_reference(adj, h, weight, bias, *, eps: float = 0.0):
    """Pure-JAX fp32 reference for correctness checking."""
    z1 = (1.0 + eps) * h + adj @ h
    x1 = jax.nn.relu(z1 @ weight + bias)
    x1 = jax.nn.relu(x1)
    z2 = (1.0 + eps) * x1 + adj @ x1
    x2 = jax.nn.relu(z2 @ weight + bias)
    return jnp.mean(x2, axis=0, keepdims=True)


if __name__ == "__main__":
    key = jax.random.PRNGKey(0)
    k_mask, k_ew, k_h, k_w, k_b = jax.random.split(key, 5)

    # Small graphs: B=4 graphs, 64 nodes each, input_dim == embed_dim == 128.
    B, N, D = 4, 64, 128

    # Dense weighted adjacency per graph: A[dst, src] = edge_weight where an edge exists.
    mask = (jax.random.uniform(k_mask, (B, N, N)) < 0.1).astype(jnp.float32)
    edge_w = jax.random.uniform(k_ew, (B, N, N), dtype=jnp.float32)
    adj_b = mask * edge_w

    h_b = jax.random.normal(k_h, (B, N, D), dtype=jnp.float32)
    weight = jax.random.normal(k_w, (D, D), dtype=jnp.float32) * (1.0 / math.sqrt(D))
    bias = jax.random.normal(k_b, (D,), dtype=jnp.float32) * 0.01

    # bf16 matmul inputs (fp32 accumulation) vs fp32 reference -> loosened tolerance.
    TOL = 2e-2

    # ---- single-graph fused kernel ----
    out1 = jax.block_until_ready(gin_forward(adj_b[0], h_b[0], weight, bias))
    ref1 = jax.block_until_ready(gin_reference(adj_b[0], h_b[0], weight, bias))
    assert out1.shape == (1, D), out1.shape
    assert bool(jnp.all(jnp.isfinite(out1))), "non-finite output (single)"
    assert bool(jnp.allclose(out1, ref1, rtol=TOL, atol=TOL)), (
        "single-graph max abs diff = %g" % float(jnp.max(jnp.abs(out1 - ref1))))

    # ---- batched kernel (grid over graphs, parallel axis) ----
    out_b = jax.block_until_ready(gin_forward_batched(adj_b, h_b, weight, bias))
    ref_b = jnp.stack([gin_reference(adj_b[g], h_b[g], weight, bias) for g in range(B)])
    ref_b = jax.block_until_ready(ref_b)
    assert out_b.shape == (B, 1, D), out_b.shape
    assert bool(jnp.all(jnp.isfinite(out_b))), "non-finite output (batched)"
    assert bool(jnp.allclose(out_b, ref_b, rtol=TOL, atol=TOL)), (
        "batched max abs diff = %g" % float(jnp.max(jnp.abs(out_b - ref_b))))

    print("KERNEL_OK")
</pallas_src>

<mosaic_0001>
module attributes {stable_mosaic.version = 11 : i64} {
  func.func @_gin_kernel_single(%arg0: memref<64x64xbf16, #tpu.memory_space<vmem>>, %arg1: memref<64x128xbf16, #tpu.memory_space<vmem>>, %arg2: memref<128x128xbf16, #tpu.memory_space<vmem>>, %arg3: memref<1x128xf32, #tpu.memory_space<vmem>>, %arg4: memref<1x128xf32, #tpu.memory_space<vmem>>) attributes {dimension_semantics = [], scalar_prefetch = 0 : i64, scratch_operands = 0 : i64, tpu.core_type = #tpu.core_type<tc>} {
    %c0 = arith.constant 0 : index
    %c0_0 = arith.constant 0 : index
    %0 = vector.load %arg0[%c0, %c0_0] : memref<64x64xbf16, #tpu.memory_space<vmem>>, vector<64x64xbf16>
    %c0_1 = arith.constant 0 : index
    %c0_2 = arith.constant 0 : index
    %1 = vector.load %arg1[%c0_1, %c0_2] : memref<64x128xbf16, #tpu.memory_space<vmem>>, vector<64x128xbf16>
    %c0_3 = arith.constant 0 : index
    %c0_4 = arith.constant 0 : index
    %2 = vector.load %arg2[%c0_3, %c0_4] : memref<128x128xbf16, #tpu.memory_space<vmem>>, vector<128x128xbf16>
    %c0_5 = arith.constant 0 : index
    %c0_6 = arith.constant 0 : index
    %3 = vector.load %arg3[%c0_5, %c0_6] : memref<1x128xf32, #tpu.memory_space<vmem>>, vector<1x128xf32>
    %cst = arith.constant dense<0.000000e+00> : vector<64x128xf32>
    %4 = tpu.matmul %0, %1, %cst {dimension_numbers = #tpu.dot_dimension_numbers<[1], [0], [0], [1], [0, 0, 1, 1], [], []>} : vector<64x64xbf16>, vector<64x128xbf16>, vector<64x128xf32> -> vector<64x128xf32>
    %5 = arith.truncf %4 : vector<64x128xf32> to vector<64x128xbf16>
    %cst_7 = arith.constant dense<0.000000e+00> : vector<64x128xf32>
    %6 = tpu.matmul %5, %2, %cst_7 {dimension_numbers = #tpu.dot_dimension_numbers<[1], [0], [0], [1], [0, 0, 1, 1], [], []>} : vector<64x128xbf16>, vector<128x128xbf16>, vector<64x128xf32> -> vector<64x128xf32>
    %7 = vector.broadcast %3 : vector<1x128xf32> to vector<64x128xf32>
    %8 = arith.addf %6, %7 : vector<64x128xf32>
    %cst_8 = arith.constant 0.000000e+00 : f32
    %9 = vector.broadcast %cst_8 : f32 to vector<64x128xf32>
    %10 = arith.maximumf %8, %9 : vector<64x128xf32>
    %11 = arith.truncf %10 : vector<64x128xf32> to vector<64x128xbf16>
    %cst_9 = arith.constant dense<0.000000e+00> : vector<64x128xf32>
    %12 = tpu.matmul %0, %11, %cst_9 {dimension_numbers = #tpu.dot_dimension_numbers<[1], [0], [0], [1], [0, 0, 1, 1], [], []>} : vector<64x64xbf16>, vector<64x128xbf16>, vector<64x128xf32> -> vector<64x128xf32>
    %13 = arith.truncf %12 : vector<64x128xf32> to vector<64x128xbf16>
    %cst_10 = arith.constant dense<0.000000e+00> : vector<64x128xf32>
    %14 = tpu.matmul %13, %2, %cst_10 {dimension_numbers = #tpu.dot_dimension_numbers<[1], [0], [0], [1], [0, 0, 1, 1], [], []>} : vector<64x128xbf16>, vector<128x128xbf16>, vector<64x128xf32> -> vector<64x128xf32>
    %15 = vector.broadcast %3 : vector<1x128xf32> to vector<64x128xf32>
    %16 = arith.addf %14, %15 : vector<64x128xf32>
    %cst_11 = arith.constant 0.000000e+00 : f32
    %17 = vector.broadcast %cst_11 : f32 to vector<64x128xf32>
    %18 = arith.maximumf %16, %17 : vector<64x128xf32>
    %cst_12 = arith.constant dense<0.000000e+00> : vector<128xf32>
    %19 = vector.multi_reduction <add>, %18, %cst_12 [0] : vector<64x128xf32> to vector<128xf32>
    %20 = vector.shape_cast %19 : vector<128xf32> to vector<1x128xf32>
    %cst_13 = arith.constant 1.562500e-02 : f32
    %21 = vector.broadcast %cst_13 : f32 to vector<1x128xf32>
    %22 = arith.mulf %20, %21 : vector<1x128xf32>
    %c0_14 = arith.constant 0 : index
    %c0_15 = arith.constant 0 : index
    %23 = vector.load %arg4[%c0_14, %c0_15] : memref<1x128xf32, #tpu.memory_space<vmem>>, vector<1x128xf32>
    tpu.vector_store %arg4[%c0_14, %c0_15], %22 {strides = array<i32>} : memref<1x128xf32, #tpu.memory_space<vmem>>, vector<1x128xf32>,
    return
  }
}

</mosaic_0001>

<llo_original>
// kernel: tpu_custom_call.1
$region0: #{tpu_custom_call.1}
  #allocation0 [shape = 'u32[]', space=smem, size = 0x4, offset = 0x4, fixed_abs, tag = 'smem constant byte address 0x4 - core index']
  #allocation1 [shape = 'u32[144,128]{1,0:T(1,128)}', space=vmem, size = 0x12000, scoped, tag = 'internal scratch']
  %s0 = inlined_call_operand.hbm [shape: bf16[64,64], index: 0, kind: input, shape index: {}]
  %s1 = inlined_call_operand.hbm [shape: bf16[64,128], index: 1, kind: input, shape index: {}]
  %s2 = inlined_call_operand.hbm [shape: bf16[128,128], index: 2, kind: input, shape index: {}]
  %s3 = inlined_call_operand.vmem [shape: f32[1,128], index: 3, kind: input, shape index: {}]
  %s4 = inlined_call_operand.hbm [shape: f32[1,128], index: 4, kind: output, shape index: {}]
  %s5 = sld [smem:[#allocation0]]
  $region38: #{tpu_custom_call.1} parent=0
    _
  %s7 = ssub.s32 1, %s5
  %s8 = scalar_select 0, %s7, %s5
  $region1: #{tpu_custom_call.1} parent=0
    #allocation2 [shape = 'u8[16384]{0}', space=vmem, size = 0x4000, scoped, tag = 'input window, operand 0, single buffered']
    #allocation3 [shape = 's32[1]{0}', space=sflag, size = 0x4, scoped, tag = 'scoped memory for tpu_custom_call.1']
    #allocation4 [shape = 's32[1]{0}', space=sflag, size = 0x4, scoped, tag = 'scoped memory for tpu_custom_call.1']
    #allocation5 [shape = 'u8[16384]{0}', space=vmem, size = 0x4000, scoped, tag = 'input window, operand 1, single buffered']
    #allocation6 [shape = 's32[1]{0}', space=sflag, size = 0x4, scoped, tag = 'scoped memory for tpu_custom_call.1']
    #allocation7 [shape = 'u8[32768]{0}', space=vmem, size = 0x8000, scoped, tag = 'input window, operand 2, single buffered']
    #allocation8 [shape = 'u8[512]{0}', space=vmem, size = 0x400, scoped, tag = 'output window, operand 0, single buffered']
    %9 = vsyncpa [#allocation3], 0
    %10 = vsyncpa [#allocation6], 0
    %11 = vsyncpa [#allocation4], 0
    // Predicated region
    $region2: #{tpu_custom_call.1} parent=1 // pred_check
      _
    $region3: #{tpu_custom_call.1} parent=1 // pred_check_branch
      %13 = sbr.rel (0) target = $region5
    $region4: #{tpu_custom_call.1} parent=1 // pred_region
      %s15 = ssub.s32 512, 512
      %16 = vsyncadd [#allocation3], %s15
      %s17 = sshll.u32 [#allocation2], 4
      %s18 = int_to_ptr.vmem [resolvable:$true] %s17
      %23 = dma.hbm_to_vmem [thread:$0]  %s0, 512, %s18, [#allocation3], 64, 64, 4
    $region5: #{tpu_custom_call.1} parent=1 // pred_fallthru
      _
    // Predicated region
    $region6: #{tpu_custom_call.1} parent=1 // pred_check
      _
    $region7: #{tpu_custom_call.1} parent=1 // pred_check_branch
      %25 = sbr.rel (0) target = $region9
    $region8: #{tpu_custom_call.1} parent=1 // pred_region
      %s27 = ssub.s32 512, 512
      %28 = vsyncadd [#allocation6], %s27
      %s29 = sshll.u32 [#allocation5], 4
      %s30 = int_to_ptr.vmem [resolvable:$true] %s29
      %35 = dma.hbm_to_vmem [thread:$0]  %s1, 512, %s30, [#allocation6], 64, 64, 4
    $region9: #{tpu_custom_call.1} parent=1 // pred_fallthru
      _
    // Predicated region
    $region10: #{tpu_custom_call.1} parent=1 // pred_check
      _
    $region11: #{tpu_custom_call.1} parent=1 // pred_check_branch
      %37 = sbr.rel (0) target = $region13
    $region12: #{tpu_custom_call.1} parent=1 // pred_region
      %s39 = ssub.s32 1024, 1024
      %40 = vsyncadd [#allocation6], %s39
      %s41 = sshll.u32 [#allocation7], 4
      %s42 = int_to_ptr.vmem [resolvable:$true] %s41
      %47 = dma.hbm_to_vmem [thread:$0]  %s2, 1024, %s42, [#allocation6], 64, 64, 4
    $region13: #{tpu_custom_call.1} parent=1 // pred_fallthru
      _
    // Predicated region
    $region14: #{tpu_custom_call.1} parent=1 // pred_check
      _
    $region15: #{tpu_custom_call.1} parent=1 // pred_check_branch
      %49 = sbr.rel (0) target = $region17
    $region16: #{tpu_custom_call.1} parent=1 // pred_region
      _
    $region17: #{tpu_custom_call.1} parent=1 // pred_fallthru
      _
    // Predicated region
    $region18: #{tpu_custom_call.1} parent=1 // pred_check
      _
    $region19: #{tpu_custom_call.1} parent=1 // pred_check_branch
      %51 = sbr.rel (0) target = $region21
    $region20: #{tpu_custom_call.1} parent=1 // pred_region
      %52 = dma.done [#allocation3], 512
    $region21: #{tpu_custom_call.1} parent=1 // pred_fallthru
      _
    // Predicated region
    $region22: #{tpu_custom_call.1} parent=1 // pred_check
      _
    $region23: #{tpu_custom_call.1} parent=1 // pred_check_branch
      %54 = sbr.rel (0) target = $region25
    $region24: #{tpu_custom_call.1} parent=1 // pred_region
      %55 = dma.done [#allocation6], 512
    $region25: #{tpu_custom_call.1} parent=1 // pred_fallthru
      _
    // Predicated region
    $region26: #{tpu_custom_call.1} parent=1 // pred_check
      _
    $region27: #{tpu_custom_call.1} parent=1 // pred_check_branch
      %57 = sbr.rel (0) target = $region29
    $region28: #{tpu_custom_call.1} parent=1 // pred_region
      %58 = dma.done [#allocation6], 1024
    $region29: #{tpu_custom_call.1} parent=1 // pred_fallthru
      _
    %v60 = vld [vmem:[#allocation2] sm:$0xf]
    %v61 = vld [vmem:[#allocation2 + $0x4] sm:$0xf]
    %v62 = vld [vmem:[#allocation2 + $0x8] sm:$0xf]
    %v63 = vld [vmem:[#allocation2 + $0xc] sm:$0xf]
    %v64 = vld [vmem:[#allocation2 + $0x10] sm:$0xf]
    %v65 = vld [vmem:[#allocation2 + $0x14] sm:$0xf]
    %v66 = vld [vmem:[#allocation2 + $0x18] sm:$0xf]
    %v67 = vld [vmem:[#allocation2 + $0x1c] sm:$0xf]
    %v68 = vld [vmem:[#allocation5] sm:$0xf]
    %v69 = vld [vmem:[#allocation5 + $0x4] sm:$0xf]
    %v70 = vld [vmem:[#allocation5 + $0x8] sm:$0xf]
    %v71 = vld [vmem:[#allocation5 + $0xc] sm:$0xf]
    %v72 = vld [vmem:[#allocation5 + $0x10] sm:$0xf]
    %v73 = vld [vmem:[#allocation5 + $0x14] sm:$0xf]
    %v74 = vld [vmem:[#allocation5 + $0x18] sm:$0xf]
    %v75 = vld [vmem:[#allocation5 + $0x1c] sm:$0xf]
    %v76 = vld [vmem:[#allocation7] sm:$0xf]
    %v77 = vld [vmem:[#allocation7 + $0x4] sm:$0xf]
    %v78 = vld [vmem:[#allocation7 + $0x8] sm:$0xf]
    %v79 = vld [vmem:[#allocation7 + $0xc] sm:$0xf]
    %v80 = vld [vmem:[#allocation7 + $0x10] sm:$0xf]
    %v81 = vld [vmem:[#allocation7 + $0x14] sm:$0xf]
    %v82 = vld [vmem:[#allocation7 + $0x18] sm:$0xf]
    %v83 = vld [vmem:[#allocation7 + $0x1c] sm:$0xf]
    %v84 = vld [vmem:[#allocation7 + $0x20] sm:$0xf]
    %v85 = vld [vmem:[#allocation7 + $0x24] sm:$0xf]
    %v86 = vld [vmem:[#allocation7 + $0x28] sm:$0xf]
    %v87 = vld [vmem:[#allocation7 + $0x2c] sm:$0xf]
    %v88 = vld [vmem:[#allocation7 + $0x30] sm:$0xf]
    %v89 = vld [vmem:[#allocation7 + $0x34] sm:$0xf]
    %v90 = vld [vmem:[#allocation7 + $0x38] sm:$0xf]
    %v91 = vld [vmem:[#allocation7 + $0x3c] sm:$0xf]
    %v92 = vld [vmem:[%s3] sm:$0x1]
    %v101 = vunpack.c.l.b16 %v60
    %v102 = vunpack.c.l.b16 %v61
    %v103 = vunpack.c.l.b16 %v62
    %v104 = vunpack.c.l.b16 %v63
    %v105 = vunpack.c.l.b16 %v64
    %v106 = vunpack.c.l.b16 %v65
    %v107 = vunpack.c.l.b16 %v66
    %v108 = vunpack.c.l.b16 %v67
    %v109 = vpack.c.b16 %v102, %v101
    %v110 = vpack.c.b16 %v104, %v103
    %v111 = vpack.c.b16 %v106, %v105
    %v112 = vpack.c.b16 %v108, %v107
    %v121 = vunpack.c.l.b16 %v68
    %v122 = vunpack.c.l.b16 %v69
    %v123 = vunpack.c.l.b16 %v70
    %v124 = vunpack.c.l.b16 %v71
    %v125 = vunpack.c.l.b16 %v72
    %v126 = vunpack.c.l.b16 %v73
    %v127 = vunpack.c.l.b16 %v74
    %v128 = vunpack.c.l.b16 %v75
    %v129 = vpack.c.b16 %v122, %v121
    %v130 = vpack.c.b16 %v124, %v123
    %v131 = vpack.c.b16 %v126, %v125
    %v132 = vpack.c.b16 %v128, %v127
    %vm137 = vcmask 523264
    %v139 = vsel %vm137, %v109, 0
    %v142 = vsel %vm137, %v110, 0
    %v145 = vsel %vm137, %v111, 0
    %v148 = vsel %vm137, %v112, 0
    %150 = vmatprep.subr.bf16.mxu0 0
    %151 = vmatpush1.bf16.msra.mxu0 %v129
    %152 = vmatprep.subr.bf16.mxu0 0
    %153 = vmatpush1.bf16.msra.mxu0 %v130
    %154 = vmatprep.subr.bf16.mxu0 0
    %155 = vmatpush1.bf16.msra.mxu0 %v131
    %156 = vmatprep.subr.bf16.mxu0 0
    %157 = vmatpush1.bf16.msra.mxu0 %v132
    %158 = vmatprep.subr.bf16.mxu0 0
    %159 = vmatpush1.bf16.msra.mxu0 0
    %160 = vmatprep.subr.bf16.mxu0 0
    %161 = vmatpush1.bf16.msra.mxu0 0
    %162 = vmatprep.subr.bf16.mxu0 0
    %163 = vmatpush1.bf16.msra.mxu0 0
    %164 = vmatprep.subr.bf16.mxu0 0
    %165 = vmatpush1.bf16.msra.mxu0 0
    %166 = vmatprep.subr.bf16.mxu0 0
    %167 = vmatpush1.bf16.msra.mxu0 0
    %168 = vmatprep.subr.bf16.mxu0 0
    %169 = vmatpush1.bf16.msra.mxu0 0
    %170 = vmatprep.subr.bf16.mxu0 0
    %171 = vmatpush1.bf16.msra.mxu0 0
    %172 = vmatprep.subr.bf16.mxu0 0
    %173 = vmatpush1.bf16.msra.mxu0 0
    %174 = vmatprep.subr.bf16.mxu0 0
    %175 = vmatpush1.bf16.msra.mxu0 0
    %176 = vmatprep.subr.bf16.mxu0 0
    %177 = vmatpush1.bf16.msra.mxu0 0
    %178 = vmatprep.subr.bf16.mxu0 0
    %179 = vmatpush1.bf16.msra.mxu0 0
    %180 = vmatprep.subr.bf16.mxu0 0
    %181 = vmatpush1.bf16.msra.mxu0 0
    %182 = vmatprep.mubr.bf16.mxu0 0
    %183 = vmatmul.mubr.bf16.gmra.mrb[0].mxu0 %v139
    %v184 = vpop.f32.mrb[0].mxu0
    %v185 = vadd.f32 0.0, %v184
    %v186 = vpop.f32.mrb[0].mxu0
    %v187 = vpop.f32.mrb[0].mxu0
    %v188 = vadd.f32 0.0, %v187
    %v189 = vpop.f32.mrb[0].mxu0
    %190 = vmatprep.mubr.bf16.mxu0 0
    %191 = vmatmul.mubr.bf16.gmra.mrb[0].mxu0 %v142
    %v192 = vpop.f32.mrb[0].mxu0
    %v193 = vadd.f32 0.0, %v192
    %v194 = vpop.f32.mrb[0].mxu0
    %v195 = vpop.f32.mrb[0].mxu0
    %v196 = vadd.f32 0.0, %v195
    %v197 = vpop.f32.mrb[0].mxu0
    %198 = vmatprep.mubr.bf16.mxu0 0
    %199 = vmatmul.mubr.bf16.gmra.mrb[0].mxu0 %v145
    %v200 = vpop.f32.mrb[0].mxu0
    %v201 = vadd.f32 0.0, %v200
    %v202 = vpop.f32.mrb[0].mxu0
    %v203 = vpop.f32.mrb[0].mxu0
    %v204 = vadd.f32 0.0, %v203
    %v205 = vpop.f32.mrb[0].mxu0
    %206 = vmatprep.mubr.bf16.mxu0 0
    %207 = vmatmul.mubr.bf16.gmra.mrb[0].mxu0 %v148
    %v208 = vpop.f32.mrb[0].mxu0
    %v209 = vadd.f32 0.0, %v208
    %v210 = vpop.f32.mrb[0].mxu0
    %v211 = vpop.f32.mrb[0].mxu0
    %v212 = vadd.f32 0.0, %v211
    %v213 = vpop.f32.mrb[0].mxu0
    %214 = vdwg.mxu0
    %v215 = vpack.c.bf16 %v188, %v185
    %v216 = vpack.c.bf16 %v196, %v193
    %v217 = vpack.c.bf16 %v204, %v201
    %v218 = vpack.c.bf16 %v212, %v209
    %v220 = vlaneseq
    %v221 = vshrl.u32 %v220, 7
    %v222 = vsub.s32 0, %v221
    %v223 = vrot.slane %v92, %v222
    %v241 = vunpack.c.l.b16 %v76
    %v242 = vunpack.c.l.b16 %v77
    %v243 = vunpack.c.l.b16 %v78
    %v244 = vunpack.c.l.b16 %v79
    %v245 = vunpack.c.l.b16 %v80
    %v246 = vunpack.c.l.b16 %v81
    %v247 = vunpack.c.l.b16 %v82
    %v248 = vunpack.c.l.b16 %v83
    %v249 = vunpack.c.l.b16 %v84
    %v250 = vunpack.c.l.b16 %v85
    %v251 = vunpack.c.l.b16 %v86
    %v252 = vunpack.c.l.b16 %v87
    %v253 = vunpack.c.l.b16 %v88
    %v254 = vunpack.c.l.b16 %v89
    %v255 = vunpack.c.l.b16 %v90
    %v256 = vunpack.c.l.b16 %v91
    %v257 = vpack.c.b16 %v242, %v241
    %v258 = vpack.c.b16 %v244, %v243
    %v259 = vpack.c.b16 %v246, %v245
    %v260 = vpack.c.b16 %v248, %v247
    %v261 = vpack.c.b16 %v250, %v249
    %v262 = vpack.c.b16 %v252, %v251
    %v263 = vpack.c.b16 %v254, %v253
    %v264 = vpack.c.b16 %v256, %v255
    %273 = vmatprep.subr.bf16.mxu0 0
    %274 = vmatpush1.bf16.msra.mxu0 %v257
    %275 = vmatprep.subr.bf16.mxu0 0
    %276 = vmatpush1.bf16.msra.mxu0 %v258
    %277 = vmatprep.subr.bf16.mxu0 0
    %278 = vmatpush1.bf16.msra.mxu0 %v259
    %279 = vmatprep.subr.bf16.mxu0 0
    %280 = vmatpush1.bf16.msra.mxu0 %v260
    %281 = vmatprep.subr.bf16.mxu0 0
    %282 = vmatpush1.bf16.msra.mxu0 %v261
    %283 = vmatprep.subr.bf16.mxu0 0
    %284 = vmatpush1.bf16.msra.mxu0 %v262
    %285 = vmatprep.subr.bf16.mxu0 0
    %286 = vmatpush1.bf16.msra.mxu0 %v263
    %287 = vmatprep.subr.bf16.mxu0 0
    %288 = vmatpush1.bf16.msra.mxu0 %v264
    %289 = vmatprep.subr.bf16.mxu0 0
    %290 = vmatpush1.bf16.msra.mxu0 0
    %291 = vmatprep.subr.bf16.mxu0 0
    %292 = vmatpush1.bf16.msra.mxu0 0
    %293 = vmatprep.subr.bf16.mxu0 0
    %294 = vmatpush1.bf16.msra.mxu0 0
    %295 = vmatprep.subr.bf16.mxu0 0
    %296 = vmatpush1.bf16.msra.mxu0 0
    %297 = vmatprep.subr.bf16.mxu0 0
    %298 = vmatpush1.bf16.msra.mxu0 0
    %299 = vmatprep.subr.bf16.mxu0 0
    %300 = vmatpush1.bf16.msra.mxu0 0
    %301 = vmatprep.subr.bf16.mxu0 0
    %302 = vmatpush1.bf16.msra.mxu0 0
    %303 = vmatprep.subr.bf16.mxu0 0
    %304 = vmatpush1.bf16.msra.mxu0 0
    %305 = vmatprep.mubr.bf16.mxu0 0
    %306 = vmatmul.mubr.bf16.gmra.mrb[0].mxu0 %v215
    %v307 = vpop.f32.mrb[0].mxu0
    %v308 = vadd.f32 %v223, %v307
    %v309 = vpop.f32.mrb[0].mxu0
    %v310 = vpop.f32.mrb[0].mxu0
    %v311 = vadd.f32 %v223, %v310
    %v312 = vpop.f32.mrb[0].mxu0
    %313 = vmatprep.mubr.bf16.mxu0 0
    %314 = vmatmul.mubr.bf16.gmra.mrb[0].mxu0 %v216
    %v315 = vpop.f32.mrb[0].mxu0
    %v316 = vadd.f32 %v223, %v315
    %v317 = vpop.f32.mrb[0].mxu0
    %v318 = vpop.f32.mrb[0].mxu0
    %v319 = vadd.f32 %v223, %v318
    %v320 = vpop.f32.mrb[0].mxu0
    %321 = vmatprep.mubr.bf16.mxu0 0
    %322 = vmatmul.mubr.bf16.gmra.mrb[0].mxu0 %v217
    %v323 = vpop.f32.mrb[0].mxu0
    %v324 = vadd.f32 %v223, %v323
    %v325 = vpop.f32.mrb[0].mxu0
    %v326 = vpop.f32.mrb[0].mxu0
    %v327 = vadd.f32 %v223, %v326
    %v328 = vpop.f32.mrb[0].mxu0
    %329 = vmatprep.mubr.bf16.mxu0 0
    %330 = vmatmul.mubr.bf16.gmra.mrb[0].mxu0 %v218
    %v331 = vpop.f32.mrb[0].mxu0
    %v332 = vadd.f32 %v223, %v331
    %v333 = vpop.f32.mrb[0].mxu0
    %v334 = vpop.f32.mrb[0].mxu0
    %v335 = vadd.f32 %v223, %v334
    %v336 = vpop.f32.mrb[0].mxu0
    %337 = vdwg.mxu0
    %v338 = vmax.f32 %v308, 0.0
    %v339 = vmax.f32 %v311, 0.0
    %v340 = vmax.f32 %v316, 0.0
    %v341 = vmax.f32 %v319, 0.0
    %v342 = vmax.f32 %v324, 0.0
    %v343 = vmax.f32 %v327, 0.0
    %v344 = vmax.f32 %v332, 0.0
    %v345 = vmax.f32 %v335, 0.0
    %v346 = vpack.c.bf16 %v339, %v338
    %v347 = vpack.c.bf16 %v341, %v340
    %v348 = vpack.c.bf16 %v343, %v342
    %v349 = vpack.c.bf16 %v345, %v344
    %350 = vmatprep.subr.bf16.mxu0 0
    %351 = vmatpush1.bf16.msra.mxu0 %v346
    %352 = vmatprep.subr.bf16.mxu0 0
    %353 = vmatpush1.bf16.msra.mxu0 %v347
    %354 = vmatprep.subr.bf16.mxu0 0
    %355 = vmatpush1.bf16.msra.mxu0 %v348
    %356 = vmatprep.subr.bf16.mxu0 0
    %357 = vmatpush1.bf16.msra.mxu0 %v349
    %358 = vmatprep.subr.bf16.mxu0 0
    %359 = vmatpush1.bf16.msra.mxu0 0
    %360 = vmatprep.subr.bf16.mxu0 0
    %361 = vmatpush1.bf16.msra.mxu0 0
    %362 = vmatprep.subr.bf16.mxu0 0
    %363 = vmatpush1.bf16.msra.mxu0 0
    %364 = vmatprep.subr.bf16.mxu0 0
    %365 = vmatpush1.bf16.msra.mxu0 0
    %366 = vmatprep.subr.bf16.mxu0 0
    %367 = vmatpush1.bf16.msra.mxu0 0
    %368 = vmatprep.subr.bf16.mxu0 0
    %369 = vmatpush1.bf16.msra.mxu0 0
    %370 = vmatprep.subr.bf16.mxu0 0
    %371 = vmatpush1.bf16.msra.mxu0 0
    %372 = vmatprep.subr.bf16.mxu0 0
    %373 = vmatpush1.bf16.msra.mxu0 0
    %374 = vmatprep.subr.bf16.mxu0 0
    %375 = vmatpush1.bf16.msra.mxu0 0
    %376 = vmatprep.subr.bf16.mxu0 0
    %377 = vmatpush1.bf16.msra.mxu0 0
    %378 = vmatprep.subr.bf16.mxu0 0
    %379 = vmatpush1.bf16.msra.mxu0 0
    %380 = vmatprep.subr.bf16.mxu0 0
    %381 = vmatpush1.bf16.msra.mxu0 0
    %382 = vmatprep.mubr.bf16.mxu0 0
    %383 = vmatmul.mubr.bf16.gmra.mrb[0].mxu0 %v139
    %v384 = vpop.f32.mrb[0].mxu0
    %v385 = vadd.f32 0.0, %v384
    %v386 = vpop.f32.mrb[0].mxu0
    %v387 = vpop.f32.mrb[0].mxu0
    %v388 = vadd.f32 0.0, %v387
    %v389 = vpop.f32.mrb[0].mxu0
    %390 = vmatprep.mubr.bf16.mxu0 0
    %391 = vmatmul.mubr.bf16.gmra.mrb[0].mxu0 %v142
    %v392 = vpop.f32.mrb[0].mxu0
    %v393 = vadd.f32 0.0, %v392
    %v394 = vpop.f32.mrb[0].mxu0
    %v395 = vpop.f32.mrb[0].mxu0
    %v396 = vadd.f32 0.0, %v395
    %v397 = vpop.f32.mrb[0].mxu0
    %398 = vmatprep.mubr.bf16.mxu0 0
    %399 = vmatmul.mubr.bf16.gmra.mrb[0].mxu0 %v145
    %v400 = vpop.f32.mrb[0].mxu0
    %v401 = vadd.f32 0.0, %v400
    %v402 = vpop.f32.mrb[0].mxu0
    %v403 = vpop.f32.mrb[0].mxu0
    %v404 = vadd.f32 0.0, %v403
    %v405 = vpop.f32.mrb[0].mxu0
    %406 = vmatprep.mubr.bf16.mxu0 0
    %407 = vmatmul.mubr.bf16.gmra.mrb[0].mxu0 %v148
    %v408 = vpop.f32.mrb[0].mxu0
    %v409 = vadd.f32 0.0, %v408
    %v410 = vpop.f32.mrb[0].mxu0
    %v411 = vpop.f32.mrb[0].mxu0
    %v412 = vadd.f32 0.0, %v411
    %v413 = vpop.f32.mrb[0].mxu0
    %414 = vdwg.mxu0
    %v415 = vpack.c.bf16 %v388, %v385
    %v416 = vpack.c.bf16 %v396, %v393
    %v417 = vpack.c.bf16 %v404, %v401
    %v418 = vpack.c.bf16 %v412, %v409
    %419 = vmatprep.subr.bf16.mxu0 0
    %420 = vmatpush1.bf16.msra.mxu0 %v257
    %421 = vmatprep.subr.bf16.mxu0 0
    %422 = vmatpush1.bf16.msra.mxu0 %v258
    %423 = vmatprep.subr.bf16.mxu0 0
    %424 = vmatpush1.bf16.msra.mxu0 %v259
    %425 = vmatprep.subr.bf16.mxu0 0
    %426 = vmatpush1.bf16.msra.mxu0 %v260
    %427 = vmatprep.subr.bf16.mxu0 0
    %428 = vmatpush1.bf16.msra.mxu0 %v261
    %429 = vmatprep.subr.bf16.mxu0 0
    %430 = vmatpush1.bf16.msra.mxu0 %v262
    %431 = vmatprep.subr.bf16.mxu0 0
    %432 = vmatpush1.bf16.msra.mxu0 %v263
    %433 = vmatprep.subr.bf16.mxu0 0
    %434 = vmatpush1.bf16.msra.mxu0 %v264
    %435 = vmatprep.subr.bf16.mxu0 0
    %436 = vmatpush1.bf16.msra.mxu0 0
    %437 = vmatprep.subr.bf16.mxu0 0
    %438 = vmatpush1.bf16.msra.mxu0 0
    %439 = vmatprep.subr.bf16.mxu0 0
    %440 = vmatpush1.bf16.msra.mxu0 0
    %441 = vmatprep.subr.bf16.mxu0 0
    %442 = vmatpush1.bf16.msra.mxu0 0
    %443 = vmatprep.subr.bf16.mxu0 0
    %444 = vmatpush1.bf16.msra.mxu0 0
    %445 = vmatprep.subr.bf16.mxu0 0
    %446 = vmatpush1.bf16.msra.mxu0 0
    %447 = vmatprep.subr.bf16.mxu0 0
    %448 = vmatpush1.bf16.msra.mxu0 0
    %449 = vmatprep.subr.bf16.mxu0 0
    %450 = vmatpush1.bf16.msra.mxu0 0
    %451 = vmatprep.mubr.bf16.mxu0 0
    %452 = vmatmul.mubr.bf16.gmra.mrb[0].mxu0 %v415
    %v453 = vpop.f32.mrb[0].mxu0
    %v454 = vadd.f32 %v223, %v453
    %v455 = vpop.f32.mrb[0].mxu0
    %v456 = vpop.f32.mrb[0].mxu0
    %v457 = vadd.f32 %v223, %v456
    %v458 = vpop.f32.mrb[0].mxu0
    %459 = vmatprep.mubr.bf16.mxu0 0
    %460 = vmatmul.mubr.bf16.gmra.mrb[0].mxu0 %v416
    %v461 = vpop.f32.mrb[0].mxu0
    %v462 = vadd.f32 %v223, %v461
    %v463 = vpop.f32.mrb[0].mxu0
    %v464 = vpop.f32.mrb[0].mxu0
    %v465 = vadd.f32 %v223, %v464
    %v466 = vpop.f32.mrb[0].mxu0
    %467 = vmatprep.mubr.bf16.mxu0 0
    %468 = vmatmul.mubr.bf16.gmra.mrb[0].mxu0 %v417
    %v469 = vpop.f32.mrb[0].mxu0
    %v470 = vadd.f32 %v223, %v469
    %v471 = vpop.f32.mrb[0].mxu0
    %v472 = vpop.f32.mrb[0].mxu0
    %v473 = vadd.f32 %v223, %v472
    %v474 = vpop.f32.mrb[0].mxu0
    %475 = vmatprep.mubr.bf16.mxu0 0
    %476 = vmatmul.mubr.bf16.gmra.mrb[0].mxu0 %v418
    %v477 = vpop.f32.mrb[0].mxu0
    %v478 = vadd.f32 %v223, %v477
    %v479 = vpop.f32.mrb[0].mxu0
    %v480 = vpop.f32.mrb[0].mxu0
    %v481 = vadd.f32 %v223, %v480
    %v482 = vpop.f32.mrb[0].mxu0
    %483 = vdwg.mxu0
    %v484 = vmax.f32 %v454, 0.0
    %v485 = vmax.f32 %v457, 0.0
    %v486 = vmax.f32 %v462, 0.0
    %v487 = vmax.f32 %v465, 0.0
    %v488 = vmax.f32 %v470, 0.0
    %v489 = vmax.f32 %v473, 0.0
    %v490 = vmax.f32 %v478, 0.0
    %v491 = vmax.f32 %v481, 0.0
    %v492 = vadd.f32 %v484, %v485
    %v493 = vadd.f32 %v492, %v486
    %v494 = vadd.f32 %v493, %v487
    %v495 = vadd.f32 %v494, %v488
    %v496 = vadd.f32 %v495, %v489
    %v497 = vadd.f32 %v496, %v490
    %v498 = vadd.f32 %v497, %v491
    %v499 = vrot.slane %v498, 4
    %v500 = vadd.f32 %v498, %v499
    %v501 = vrot.slane %v500, 2
    %v502 = vadd.f32 %v500, %v501
    %v503 = vrot.slane %v502, 1
    %v504 = vadd.f32 %v502, %v503
    %v505 = vmul.f32 %v504, 0.015625
    %506 = vst [vmem:[#allocation8] sm:$0x1] %v505
    // Predicated region
    $region30: #{tpu_custom_call.1} parent=1 // pred_check
      _
    $region31: #{tpu_custom_call.1} parent=1 // pred_check_branch
      %508 = sbr.rel (0) target = $region33
    $region32: #{tpu_custom_call.1} parent=1 // pred_region
      %s510 = ssub.s32 16, 16
      %511 = vsyncadd [#allocation4], %s510
      %s513 = sshll.u32 [#allocation8], 4
      %s514 = int_to_ptr.vmem [resolvable:$true] %s513
      %516 = dma.vmem_to_hbm [thread:$0]  %s514, 16, %s4, [#allocation4]
    $region33: #{tpu_custom_call.1} parent=1 // pred_fallthru
      _
    // Predicated region
    $region34: #{tpu_custom_call.1} parent=1 // pred_check
      _
    $region35: #{tpu_custom_call.1} parent=1 // pred_check_branch
      %518 = sbr.rel (0) target = $region37
    $region36: #{tpu_custom_call.1} parent=1 // pred_region
      %519 = dma.done [#allocation4], 16
    $region37: #{tpu_custom_call.1} parent=1 // pred_fallthru
      _
    %520 = vsyncpa [#allocation3], 1
    %521 = vsyncpa [#allocation6], 1
    %522 = vsyncpa [#allocation4], 1

</llo_original>
